<compile_context>
chip_gen: v5e
topology: v5e:2x2
jax: 0.10.0
libtpu: 0.0.40
codegen_flags: <defaults>
</compile_context>

<pallas_src>
import math

import jax
import jax.numpy as jnp
from jax.experimental import pallas as pl
from jax.experimental.pallas import tpu as pltpu


def _identity_copy_kernel(x_ref, o_ref):
    # Pure data pass-through of one (tb, tn) tile through VMEM.
    o_ref[...] = x_ref[...]


def _pick_tiles(B, N, itemsize):
    """Pick lane-dense, VMEM-safe tile sizes.

    Last dim: full N if small, else 2048 (multiple of 128 -> unmasked vst).
    Rows: full B if small, else a multiple of 8 (sublane tiling), bounded so a
    single tile is <= ~2 MiB; with double-buffered input + output that is
    <= ~8 MiB of VMEM, far below every generation's default scoped limit.
    """
    if N <= 2048:
        tn = N                      # full extent is always a legal block dim
    else:
        tn = 2048                   # large multiple of 128 -> lane-dense
    max_rows = max(1, (2 * 1024 * 1024) // (tn * itemsize))
    if B <= max_rows:
        tb = B                      # full extent
    elif max_rows >= 8:
        tb = (max_rows // 8) * 8    # multiple of 8
    else:
        tb = 8
    return tb, tn


def reshape_to_matrix(x: jax.Array) -> jax.Array:
    """Pallas equivalent of the PyTorch reshape_to_matrix.forward.

    x: (B, N) with N a perfect square. Returns (B, sqrt(N), sqrt(N)).
    """
    B, N = x.shape
    mat_dim = int(math.isqrt(N))
    assert mat_dim * mat_dim == N, "second dim must be a perfect square"

    tb, tn = _pick_tiles(B, N, jnp.dtype(x.dtype).itemsize)
    grid = (pl.cdiv(B, tb), pl.cdiv(N, tn))

    flat = pl.pallas_call(
        _identity_copy_kernel,
        out_shape=jax.ShapeDtypeStruct((B, N), x.dtype),
        grid_spec=pl.GridSpec(
            grid=grid,
            in_specs=[pl.BlockSpec((tb, tn), lambda i, j: (i, j))],
            out_specs=pl.BlockSpec((tb, tn), lambda i, j: (i, j)),
        ),
        # Output aliases the input buffer: no extra (B, N) allocation and no
        # redundant writeback when the caller donates / drops the input.
        input_output_aliases={0: 0},
        compiler_params=pltpu.CompilerParams(
            dimension_semantics=("parallel", "parallel"),
        ),
    )(x)

    # Metadata-only view, equivalent to torch's x.view(B, mat_dim, mat_dim).
    return jnp.reshape(flat, (B, mat_dim, mat_dim))


if __name__ == "__main__":
    key = jax.random.PRNGKey(0)
    B, N = 2, 256  # mat_dim = 16
    x = jax.random.normal(key, (B, N), dtype=jnp.float32)

    # Compute + materialize the reference before running the aliasing kernel.
    ref = jax.block_until_ready(jnp.reshape(x, (B, 16, 16)))

    out = jax.block_until_ready(reshape_to_matrix(x))

    assert out.shape == (B, 16, 16)
    assert out.dtype == x.dtype
    assert bool(jnp.all(out == ref))

    print("KERNEL_OK")
</pallas_src>

<mosaic_0001>
module attributes {stable_mosaic.version = 11 : i64} {
  func.func @_identity_copy_kernel(%arg0: i32, %arg1: i32, %arg2: memref<2x256xf32, #tpu.memory_space<vmem>>, %arg3: memref<2x256xf32, #tpu.memory_space<vmem>>) attributes {dimension_semantics = [#tpu.dimension_semantics<parallel>, #tpu.dimension_semantics<parallel>], iteration_bounds = array<i64: 1, 1>, scalar_prefetch = 0 : i64, scratch_operands = 0 : i64, tpu.core_type = #tpu.core_type<tc>, window_params = [{transform_indices = @transform_0, window_bounds = array<i64: 2, 256>}, {transform_indices = @transform_1, window_bounds = array<i64: 2, 256>}]} {
    %c0 = arith.constant 0 : index
    %c0_0 = arith.constant 0 : index
    %0 = vector.load %arg2[%c0, %c0_0] : memref<2x256xf32, #tpu.memory_space<vmem>>, vector<2x256xf32>
    %c0_1 = arith.constant 0 : index
    %c0_2 = arith.constant 0 : index
    %1 = vector.load %arg3[%c0_1, %c0_2] : memref<2x256xf32, #tpu.memory_space<vmem>>, vector<2x256xf32>
    tpu.vector_store %arg3[%c0_1, %c0_2], %0 {strides = array<i32>} : memref<2x256xf32, #tpu.memory_space<vmem>>, vector<2x256xf32>,
    return
  }
  func.func @transform_0(%arg0: i32, %arg1: i32) -> (i32, i32) {
    %c0_i32 = arith.constant 0 : i32
    return %arg0, %arg1 : i32, i32
  }
  func.func @transform_1(%arg0: i32, %arg1: i32) -> (i32, i32) {
    %c0_i32 = arith.constant 0 : i32
    return %arg0, %arg1 : i32, i32
  }
}

</mosaic_0001>

<llo_original>
// kernel: tpu_custom_call.1
$region0: #{tpu_custom_call.1}
  #allocation0 [shape = 'u32[]', space=smem, size = 0x4, offset = 0x4, fixed_abs, tag = 'smem constant byte address 0x4 - core index']
  #allocation1 [shape = 'u32[72,128]{1,0:T(1,128)}', space=vmem, size = 0x9000, scoped, tag = 'internal scratch']
  %s0 = inlined_call_operand.hbm [shape: f32[2,256], index: 0, kind: input, shape index: {}, may-alias: {0,1}]
  %s1 = inlined_call_operand.hbm [shape: f32[2,256], index: 1, kind: output, shape index: {}, may-alias: {0,1}]
  %s2 = sld [smem:[#allocation0]]
  $region18: #{tpu_custom_call.1} parent=0
    _
  %s4 = ssub.s32 1, %s2
  %s5 = scalar_select 0, %s4, %s2
  $region1: #{tpu_custom_call.1} parent=0
    #allocation2 [shape = 'u8[2048]{0}', space=vmem, size = 0x800, scoped, tag = 'input window, operand 0, single buffered']
    #allocation3 [shape = 's32[1]{0}', space=sflag, size = 0x4, scoped, tag = 'scoped memory for tpu_custom_call.1']
    #allocation4 [shape = 's32[1]{0}', space=sflag, size = 0x4, scoped, tag = 'scoped memory for tpu_custom_call.1']
    #allocation5 [shape = 'u8[2048]{0}', space=vmem, size = 0x800, scoped, tag = 'output window, operand 0, single buffered']
    %6 = vsyncpa [#allocation3], 0
    %7 = vsyncpa [#allocation4], 0
    // Predicated region
    $region2: #{tpu_custom_call.1} parent=1 // pred_check
      _
    $region3: #{tpu_custom_call.1} parent=1 // pred_check_branch
      %9 = sbr.rel (0) target = $region5
    $region4: #{tpu_custom_call.1} parent=1 // pred_region
      %11 = vsyncadd [#allocation3], 0
      %s13 = sshll.u32 %s0, 4
      %s14 = int_to_ptr.hbm [resolvable:$true] %s13
      %s15 = sshll.u32 [#allocation2], 4
      %s16 = int_to_ptr.vmem [resolvable:$true] %s15
      %18 = dma.hbm_to_vmem [thread:$0]  %s14, 64, %s16, [#allocation3]
    $region5: #{tpu_custom_call.1} parent=1 // pred_fallthru
      _
    // Predicated region
    $region6: #{tpu_custom_call.1} parent=1 // pred_check
      _
    $region7: #{tpu_custom_call.1} parent=1 // pred_check_branch
      %20 = sbr.rel (0) target = $region9
    $region8: #{tpu_custom_call.1} parent=1 // pred_region
      %22 = dma.done [#allocation3], 64
    $region9: #{tpu_custom_call.1} parent=1 // pred_fallthru
      _
    %v23 = vld [vmem:[#allocation2] sm:$0xf]
    %24 = vst [vmem:[#allocation5] sm:$0xf] %v23
    // Predicated region
    $region10: #{tpu_custom_call.1} parent=1 // pred_check
      _
    $region11: #{tpu_custom_call.1} parent=1 // pred_check_branch
      %26 = sbr.rel (0) target = $region13
    $region12: #{tpu_custom_call.1} parent=1 // pred_region
      %28 = vsyncadd [#allocation4], 0
      %s30 = sshll.u32 [#allocation5], 4
      %s31 = int_to_ptr.vmem [resolvable:$true] %s30
      %s32 = sshll.u32 %s1, 4
      %s33 = int_to_ptr.hbm [resolvable:$true] %s32
      %35 = dma.vmem_to_hbm [thread:$0]  %s31, 64, %s33, [#allocation4]
    $region13: #{tpu_custom_call.1} parent=1 // pred_fallthru
      _
    // Predicated region
    $region14: #{tpu_custom_call.1} parent=1 // pred_check
      _
    $region15: #{tpu_custom_call.1} parent=1 // pred_check_branch
      %37 = sbr.rel (0) target = $region17
    $region16: #{tpu_custom_call.1} parent=1 // pred_region
      %39 = dma.done [#allocation4], 64
    $region17: #{tpu_custom_call.1} parent=1 // pred_fallthru
      _
    %40 = vsyncpa [#allocation3], 1
    %41 = vsyncpa [#allocation4], 1

</llo_original>
